<compile_context>
chip_gen: v5e
topology: v5e:2x2
jax: 0.10.0
libtpu: 0.0.40
codegen_flags: <defaults>
</compile_context>

<pallas_src>
import math
from functools import partial

import jax
import jax.numpy as jnp
from jax.experimental import pallas as pl
from jax.experimental.pallas import tpu as pltpu


def _round_up(a: int, b: int) -> int:
    return ((a + b - 1) // b) * b


# ---------------------------------------------------------------------------
# Kernel: one row-tile of x  +  embedding-table lookup of the matching indices
# ---------------------------------------------------------------------------
def _temporal_embedding_kernel(idx_ref, x_ref, tbl_ref, o_ref, *, compute_dtype):
    idx = idx_ref[...]                       # (TR, 1) int32 time indices
    rows = idx.shape[0]
    vocab = tbl_ref.shape[0]

    # Gather via one-hot matmul on the MXU (robust TPU gather for small vocab).
    onehot = (jax.lax.broadcasted_iota(jnp.int32, (rows, vocab), 1) == idx)
    onehot = onehot.astype(tbl_ref.dtype)
    emb = jnp.dot(onehot, tbl_ref[...], preferred_element_type=jnp.float32)  # (TR, D)

    # Fused residual add, stored lane-dense (full D on the lane axis).
    # Rows past the true R (partial last block) are masked by Pallas on store.
    o_ref[...] = (x_ref[...].astype(compute_dtype)
                  + emb.astype(compute_dtype)).astype(o_ref.dtype)


# ---------------------------------------------------------------------------
# Wrapper: flatten leading dims, tile rows, call the kernel (no x padding)
# ---------------------------------------------------------------------------
def temporal_embedding(x, time_index_matrix, embed_table, *,
                       row_tile=4096,
                       vmem_target_bytes=12 * 1024 * 1024,
                       compute_dtype=jnp.float32,
                       donate_x=False):
    """x: (..., D) float; time_index_matrix: (...) int; embed_table: (V, D)."""
    orig_shape = x.shape
    D = x.shape[-1]
    V = embed_table.shape[0]
    R = math.prod(x.shape[:-1]) if x.ndim > 1 else 1

    xf = x.reshape(R, D)
    idxf = time_index_matrix.reshape(R, 1).astype(jnp.int32)

    xbytes = jnp.dtype(x.dtype).itemsize
    tbytes = jnp.dtype(embed_table.dtype).itemsize

    # dtype-aware sublane alignment: 8 rows (4B dtypes), 16 (bf16), 32 (int8/fp8).
    align = max(8, 32 // xbytes)

    # VMEM cost per tile row (double-buffered x + out, plus the (TR,1) index
    # block whose lane dim is padded to 128 in VMEM, double-buffered).
    per_row = 4 * D * xbytes + 2 * 128 * 4
    tr = min(row_tile, max(align, vmem_target_bytes // per_row))
    # Guarantee >= 2 grid steps whenever possible so both v7x TensorCores work.
    tr = min(tr, _round_up(max(1, -(-R // 2)), align))
    tr = max(align, (tr // align) * align)

    num_tiles = -(-R // tr)          # partial last block handled by Pallas masking

    # Pad ONLY the tiny index array (R*4 bytes) so its blocks are always full;
    # padded rows use index 0 (valid lookup) and their results are never stored.
    rp_idx = num_tiles * tr
    if rp_idx != R:
        idxf = jnp.pad(idxf, ((0, rp_idx - R), (0, 0)))

    # Explicit VMEM limit: >= the default scoped limit on every generation
    # (raises v5e's 16 MiB default), capped well below v7x's 64 MiB physical.
    working_set = tr * per_row + 2 * V * D * tbytes
    vmem_limit = int(min(max(32 * 1024 * 1024, 2 * working_set), 48 * 1024 * 1024))

    cost = pl.CostEstimate(
        flops=2 * R * V * D + R * D,
        transcendentals=0,
        bytes_accessed=2 * R * D * xbytes        # x in, out
        + R * 4                                  # indices
        + V * D * tbytes,                        # table (VMEM-resident, DMA'd once)
    )

    kernel = partial(_temporal_embedding_kernel, compute_dtype=compute_dtype)

    out = pl.pallas_call(
        kernel,
        out_shape=jax.ShapeDtypeStruct((R, D), x.dtype),
        grid=(num_tiles,),
        in_specs=[
            pl.BlockSpec((tr, 1), lambda i: (i, 0)),   # time indices for this row tile
            pl.BlockSpec((tr, D), lambda i: (i, 0)),   # x row tile
            pl.BlockSpec((V, D), lambda i: (0, 0)),    # table: constant index -> resident
        ],
        out_specs=pl.BlockSpec((tr, D), lambda i: (i, 0)),
        compiler_params=pltpu.CompilerParams(
            dimension_semantics=("parallel",),
            vmem_limit_bytes=vmem_limit,
        ),
        cost_estimate=cost,
        input_output_aliases=({1: 0} if donate_x else {}),
    )(idxf, xf, embed_table)

    return out.reshape(orig_shape)


if __name__ == "__main__":
    # Small shapes consistent with the module: x (B, N, D), indices (B, N).
    B, N = 2, 8
    num_embeddings, embed_dim = 16, 128   # lane-dense embed_dim (multiple of 128)

    key = jax.random.PRNGKey(0)
    kx, kt, ki = jax.random.split(key, 3)
    x = jax.random.normal(kx, (B, N, embed_dim), jnp.float32)
    embed_table = 0.05 * jax.random.normal(kt, (num_embeddings, embed_dim), jnp.float32)
    time_index_matrix = jax.random.randint(ki, (B, N), 0, num_embeddings, jnp.int32)

    out = temporal_embedding(x, time_index_matrix, embed_table)
    jax.block_until_ready(out)

    ref = x + embed_table[time_index_matrix]
    assert out.shape == x.shape
    assert jnp.allclose(out, ref, atol=1e-5, rtol=1e-5)
    print("KERNEL_OK")
</pallas_src>

<mosaic_0001>
module attributes {stable_mosaic.version = 11 : i64} {
  func.func @_temporal_embedding_kernel(%arg0: i32, %arg1: memref<8x1xi32, #tpu.memory_space<vmem>>, %arg2: memref<8x128xf32, #tpu.memory_space<vmem>>, %arg3: memref<16x128xf32, #tpu.memory_space<vmem>>, %arg4: memref<8x128xf32, #tpu.memory_space<vmem>>) attributes {dimension_semantics = [#tpu.dimension_semantics<parallel>], iteration_bounds = array<i64: 2>, scalar_prefetch = 0 : i64, scratch_operands = 0 : i64, tpu.core_type = #tpu.core_type<tc>, window_params = [{transform_indices = @transform_0, window_bounds = array<i64: 8, 1>}, {transform_indices = @transform_1, window_bounds = array<i64: 8, 128>}, {pipeline_mode = #tpu.pipeline_mode<synchronous>, transform_indices = @transform_2, window_bounds = array<i64: 16, 128>}, {transform_indices = @transform_3, window_bounds = array<i64: 8, 128>}]} {
    %c0 = arith.constant 0 : index
    %c0_0 = arith.constant 0 : index
    %0 = vector.load %arg1[%c0, %c0_0] : memref<8x1xi32, #tpu.memory_space<vmem>>, vector<8x1xi32>
    %1 = tpu.iota {dimensions = array<i32: 1>} : vector<8x16xi32>
    %2 = vector.broadcast %0 : vector<8x1xi32> to vector<8x16xi32>
    %3 = arith.cmpi eq, %1, %2 : vector<8x16xi32>
    %4 = arith.extui %3 : vector<8x16xi1> to vector<8x16xi32>
    %5 = arith.sitofp %4 : vector<8x16xi32> to vector<8x16xf32>
    %c0_1 = arith.constant 0 : index
    %c0_2 = arith.constant 0 : index
    %6 = vector.load %arg3[%c0_1, %c0_2] : memref<16x128xf32, #tpu.memory_space<vmem>>, vector<16x128xf32>
    %cst = arith.constant dense<0.000000e+00> : vector<8x128xf32>
    %7 = tpu.matmul %5, %6, %cst {dimension_numbers = #tpu.dot_dimension_numbers<[1], [0], [0], [1], [0, 0, 1, 1], [], []>} : vector<8x16xf32>, vector<16x128xf32>, vector<8x128xf32> -> vector<8x128xf32>
    %c0_3 = arith.constant 0 : index
    %c0_4 = arith.constant 0 : index
    %8 = vector.load %arg2[%c0_3, %c0_4] : memref<8x128xf32, #tpu.memory_space<vmem>>, vector<8x128xf32>
    %9 = arith.addf %8, %7 : vector<8x128xf32>
    %c0_5 = arith.constant 0 : index
    %c0_6 = arith.constant 0 : index
    %10 = vector.load %arg4[%c0_5, %c0_6] : memref<8x128xf32, #tpu.memory_space<vmem>>, vector<8x128xf32>
    tpu.vector_store %arg4[%c0_5, %c0_6], %9 {strides = array<i32>} : memref<8x128xf32, #tpu.memory_space<vmem>>, vector<8x128xf32>,
    return
  }
  func.func @transform_0(%arg0: i32) -> (i32, i32) {
    %c0_i32 = arith.constant 0 : i32
    %c0_i32_0 = arith.constant 0 : i32
    return %arg0, %c0_i32 : i32, i32
  }
  func.func @transform_1(%arg0: i32) -> (i32, i32) {
    %c0_i32 = arith.constant 0 : i32
    %c0_i32_0 = arith.constant 0 : i32
    return %arg0, %c0_i32 : i32, i32
  }
  func.func @transform_2(%arg0: i32) -> (i32, i32) {
    %c0_i32 = arith.constant 0 : i32
    %c0_i32_0 = arith.constant 0 : i32
    %c0_i32_1 = arith.constant 0 : i32
    return %c0_i32, %c0_i32_0 : i32, i32
  }
  func.func @transform_3(%arg0: i32) -> (i32, i32) {
    %c0_i32 = arith.constant 0 : i32
    %c0_i32_0 = arith.constant 0 : i32
    return %arg0, %c0_i32 : i32, i32
  }
}

</mosaic_0001>

<llo_original>
// kernel: tpu_custom_call.1
$region0: #{tpu_custom_call.1}
  #allocation0 [shape = 'u32[]', space=smem, size = 0x4, offset = 0x4, fixed_abs, tag = 'smem constant byte address 0x4 - core index']
  #allocation1 [shape = 'u32[72,128]{1,0:T(1,128)}', space=vmem, size = 0x9000, scoped, tag = 'internal scratch']
  %s0 = inlined_call_operand.vmem [shape: s32[16,1], index: 0, kind: input, shape index: {}]
  %s1 = inlined_call_operand.vmem [shape: f32[16,128], index: 1, kind: input, shape index: {}]
  %s2 = inlined_call_operand.hbm [shape: f32[16,128], index: 2, kind: input, shape index: {}]
  %s3 = inlined_call_operand.hbm [shape: f32[16,128], index: 3, kind: output, shape index: {}]
  %s4 = sld [smem:[#allocation0]]
  $region49: #{tpu_custom_call.1} parent=0
    _
  %s6 = ssub.s32 1, %s4
  %s7 = scalar_select 0, %s6, %s4
  $region1: #{tpu_custom_call.1} parent=0
    #allocation2 [shape = 'u8[8192]{0}', space=vmem, size = 0x2000, scoped, tag = 'input window, operand 2, single buffered']
    #allocation3 [shape = 's32[2]{0}', space=sflag, size = 0x8, scoped, tag = 'scoped memory for tpu_custom_call.1']
    #allocation4 [shape = 's32[2]{0}', space=sflag, size = 0x8, scoped, tag = 'scoped memory for tpu_custom_call.1']
    #allocation5 [shape = 'u8[8192]{0}', space=vmem, size = 0x2000, scoped, tag = 'output window, operand 0']
    %8 = vsyncpa [#allocation3], 0
    %9 = vsyncpa [#allocation4], 0
    %s10 = scalar_lea.sflag [#allocation4], 1
    %11 = vsyncpa %s10, 0
    loop: start=0, step=1, limit=4
    $region2: #{tpu_custom_call.1} parent=1 // loop_pre_header
      _
    $region3: #{tpu_custom_call.1} parent=1 // loop_header
      %s13 = sphi 0, %s17
      %p14 = scmp.ge.s32.totalorder %s13, 4
      %s23 = sphi 0, %s25
      %s26 = sphi 0, %s23
      %s27 = sphi 0, %s26
      %s43 = sphi 0, %s27
      %s49 = sphi 0, %s51
      %s52 = sphi 0, %s49
      %s53 = sphi 0, %s52
      %s69 = sphi 0, %s53
      %s73 = sphi 0, %s73
      %s75 = sphi 0, %s73
      %s76 = sphi 0, %s75
      %s90 = sphi 0, %s76
      %s96 = sphi 0, %s98
      %s99 = sphi 0, %s96
      %s100 = sphi 0, %s99
      %s116 = sphi 0, %s100
    $region4: #{tpu_custom_call.1} parent=1 // loop_header_branch
      %16 = sbr.rel (%p14) target = $region8
    $region5: #{tpu_custom_call.1} parent=1 // loop_body
      %s18 = ssub.s32 %s13, 1
      %s19 = ssub.s32 %s13, 2
      %s20 = sadd.s32 %s13, 1
      %s21 = ssub.s32 %s13, %s20
      %p22 = scmp.eq.s32.totalorder %s21, 0
      %s24 = sadd.s32 %s23, 1
      %s25 = scalar_select %p22, %s23, %s24
      %p28 = pneg %p22
      %p29 = scmp.eq.s32.totalorder %s13, 1
      %p30 = por %p28, %p29
      %p31 = scmp.ne.s32.totalorder %s23, %s26
      %p32 = scmp.eq.s32.totalorder %s13, 0
      %p33 = por %p31, %p32
      %p34 = scmp.ne.s32.totalorder %s23, %s26
      %p35 = scmp.eq.s32.totalorder %s18, 1
      %p36 = por %p34, %p35
      %p37 = scmp.ne.s32.totalorder %s26, %s27
      %p38 = scmp.eq.s32.totalorder %s18, 0
      %p39 = por %p37, %p38
      %p40 = scmp.ne.s32.totalorder %s26, %s27
      %p41 = scmp.eq.s32.totalorder %s19, 1
      %p42 = por %p40, %p41
      %p44 = scmp.ne.s32.totalorder %s27, %s43
      %p45 = scmp.eq.s32.totalorder %s19, 0
      %p46 = por %p44, %p45
      %s47 = ssub.s32 %s13, %s20
      %p48 = scmp.eq.s32.totalorder %s47, 0
      %s50 = sadd.s32 %s49, 1
      %s51 = scalar_select %p48, %s49, %s50
      %p54 = pneg %p48
      %p55 = scmp.eq.s32.totalorder %s13, 1
      %p56 = por %p54, %p55
      %p57 = scmp.ne.s32.totalorder %s49, %s52
      %p58 = scmp.eq.s32.totalorder %s13, 0
      %p59 = por %p57, %p58
      %p60 = scmp.ne.s32.totalorder %s49, %s52
      %p61 = scmp.eq.s32.totalorder %s18, 1
      %p62 = por %p60, %p61
      %p63 = scmp.ne.s32.totalorder %s52, %s53
      %p64 = scmp.eq.s32.totalorder %s18, 0
      %p65 = por %p63, %p64
      %p66 = scmp.ne.s32.totalorder %s52, %s53
      %p67 = scmp.eq.s32.totalorder %s19, 1
      %p68 = por %p66, %p67
      %p70 = scmp.ne.s32.totalorder %s53, %s69
      %p71 = scmp.eq.s32.totalorder %s19, 0
      %p72 = por %p70, %p71
      %s74 = sadd.s32 %s73, 1
      %p77 = scmp.eq.s32.totalorder %s13, 1
      %p78 = scmp.ne.s32.totalorder %s73, %s75
      %p79 = scmp.eq.s32.totalorder %s13, 0
      %p80 = por %p78, %p79
      %p81 = scmp.ne.s32.totalorder %s73, %s75
      %p82 = scmp.eq.s32.totalorder %s18, 1
      %p83 = por %p81, %p82
      %p84 = scmp.ne.s32.totalorder %s75, %s76
      %p85 = scmp.eq.s32.totalorder %s18, 0
      %p86 = por %p84, %p85
      %p87 = scmp.ne.s32.totalorder %s75, %s76
      %p88 = scmp.eq.s32.totalorder %s19, 1
      %p89 = por %p87, %p88
      %p91 = scmp.ne.s32.totalorder %s76, %s90
      %p92 = scmp.eq.s32.totalorder %s19, 0
      %p93 = por %p91, %p92
      %s94 = ssub.s32 %s13, %s20
      %p95 = scmp.eq.s32.totalorder %s94, 0
      %s97 = sadd.s32 %s96, 1
      %s98 = scalar_select %p95, %s96, %s97
      %p101 = pneg %p95
      %p102 = scmp.eq.s32.totalorder %s13, 1
      %p103 = por %p101, %p102
      %p104 = scmp.ne.s32.totalorder %s96, %s99
      %p105 = scmp.eq.s32.totalorder %s13, 0
      %p106 = por %p104, %p105
      %p107 = scmp.ne.s32.totalorder %s96, %s99
      %p108 = scmp.eq.s32.totalorder %s18, 1
      %p109 = por %p107, %p108
      %p110 = scmp.ne.s32.totalorder %s99, %s100
      %p111 = scmp.eq.s32.totalorder %s18, 0
      %p112 = por %p110, %p111
      %p113 = scmp.ne.s32.totalorder %s99, %s100
      %p114 = scmp.eq.s32.totalorder %s19, 1
      %p115 = por %p113, %p114
      %p117 = scmp.ne.s32.totalorder %s100, %s116
      %p118 = scmp.eq.s32.totalorder %s19, 0
      %p119 = por %p117, %p118
      %p120 = scmp.le.s32.totalorder 1, %s13
      %p121 = scmp.lt.s32.totalorder %s13, 3
      %p122 = pnand %p120, %p121
      %p123 = pneg %p122
      // Predicated region
      $region9: #{tpu_custom_call.1} parent=5 // pred_check
        _
      $region10: #{tpu_custom_call.1} parent=5 // pred_check_branch
        %125 = sbr.rel (%p122) target = $region12
      $region11: #{tpu_custom_call.1} parent=5 // pred_region
        %s126 = ssub.s32 %s13, 1
        // Predicated region
        $region13: #{tpu_custom_call.1} parent=11 // pred_check
          %p127 = pneg %p86
        $region14: #{tpu_custom_call.1} parent=11 // pred_check_branch
          %129 = sbr.rel (%p127) target = $region16
        $region15: #{tpu_custom_call.1} parent=11 // pred_region
          %131 = vsyncadd [#allocation3], 0
          %s132 = sshll.u32 %s2, 4
          %s133 = int_to_ptr.hbm [resolvable:$true] %s132
          %s134 = sshll.u32 [#allocation2], 4
          %s135 = int_to_ptr.vmem [resolvable:$true] %s134
          %140 = dma.hbm_to_vmem [thread:$0]  %s133, 256, %s135, [#allocation3], 128, 128, 8
        $region16: #{tpu_custom_call.1} parent=11 // pred_fallthru
          _
      $region12: #{tpu_custom_call.1} parent=5 // pred_fallthru
        _
      %p141 = scmp.lt.s32.totalorder %s13, 2
      // Predicated region
      $region17: #{tpu_custom_call.1} parent=5 // pred_check
        %p142 = pneg %p141
      $region18: #{tpu_custom_call.1} parent=5 // pred_check_branch
        %144 = sbr.rel (%p142) target = $region20
      $region19: #{tpu_custom_call.1} parent=5 // pred_region
        // Predicated region
        $region21: #{tpu_custom_call.1} parent=19 // pred_check
          %p145 = pneg %p33
        $region22: #{tpu_custom_call.1} parent=19 // pred_check_branch
          %147 = sbr.rel (%p145) target = $region24
        $region23: #{tpu_custom_call.1} parent=19 // pred_region
          %p148 = scmp.lt.s32.totalorder %s13, 1
          %s149 = scalar_select %p148, %s13, 1
          %s150 = smul.addr %s149, 8
          %s151 = scalar_lea.vmem %s0, %s150
        $region24: #{tpu_custom_call.1} parent=19 // pred_fallthru
          _
        // Predicated region
        $region25: #{tpu_custom_call.1} parent=19 // pred_check
          %p152 = pneg %p59
        $region26: #{tpu_custom_call.1} parent=19 // pred_check_branch
          %154 = sbr.rel (%p152) target = $region28
        $region27: #{tpu_custom_call.1} parent=19 // pred_region
          %p155 = scmp.lt.s32.totalorder %s13, 1
          %s156 = scalar_select %p155, %s13, 1
          %s157 = smul.addr %s156, 8
          %s158 = scalar_lea.vmem %s1, %s157
        $region28: #{tpu_custom_call.1} parent=19 // pred_fallthru
          _
      $region20: #{tpu_custom_call.1} parent=5 // pred_fallthru
        _
      %p159 = scmp.le.s32.totalorder 1, %s13
      %p160 = scmp.lt.s32.totalorder %s13, 3
      %p161 = pnand %p159, %p160
      %p162 = pneg %p161
      // Predicated region
      $region29: #{tpu_custom_call.1} parent=5 // pred_check
        _
      $region30: #{tpu_custom_call.1} parent=5 // pred_check_branch
        %164 = sbr.rel (%p161) target = $region32
      $region31: #{tpu_custom_call.1} parent=5 // pred_region
        %s165 = ssub.s32 %s13, 1
        // Predicated region
        $region33: #{tpu_custom_call.1} parent=31 // pred_check
          %p166 = pneg %p86
        $region34: #{tpu_custom_call.1} parent=31 // pred_check_branch
          %168 = sbr.rel (%p166) target = $region36
        $region35: #{tpu_custom_call.1} parent=31 // pred_region
          %170 = dma.done [#allocation3], 256
        $region36: #{tpu_custom_call.1} parent=31 // pred_fallthru
          _
        %p171 = scmp.lt.s32.totalorder %s18, 1
        %s172 = scalar_select %p171, %s18, 1
        %s173 = smul.addr %s172, 8
        %s174 = scalar_lea.vmem %s0, %s173
        %p175 = pneg %p39
        %p176 = pneg %p36
        %p177 = scmp.lt.s32.totalorder %s18, 1
        %s178 = scalar_select %p177, %s18, 1
        %s179 = smul.addr %s178, 8
        %s180 = scalar_lea.vmem %s1, %s179
        %p181 = pneg %p65
        %p182 = pneg %p62
        %p183 = pneg %p86
        %p184 = pneg %p83
        %p185 = pneg %p112
        %p186 = pneg %p109
        %s187 = sand.u32 %s99, 1
        %s188 = scalar_lea.sflag [#allocation4], %s187
        %s189 = sand.u32 %s99, 1
        %s190 = smul.addr %s189, 8
        %s191 = scalar_lea.vmem [#allocation5], %s190
        %p192 = scmp.lt.s32.totalorder %s18, 1
        %s193 = scalar_select %p192, %s18, 1
        %s194 = smul.addr %s193, 8
        %s195 = scalar_lea.vmem %s0, %s194
        %p196 = scmp.lt.s32.totalorder %s18, 1
        %s197 = scalar_select %p196, %s18, 1
        %s198 = smul.addr %s197, 8
        %s199 = scalar_lea.vmem %s1, %s198
        %v200 = vld [vmem:[%s195] sm:$0xff]
        %v201 = vlaneseq
        %v202 = vand.u32 %v201, 127
        %203 = vset.pattern.permute.xlu0 0
        %204 = vperm.xlu0 %203, %v200
        %v205 = vpop.permute.xlu0 %204
        %vm206 = vcmp.eq.s32.totalorder %v202, %v205
        %v207 = vsel %vm206, 1, 0
        %v208 = vcvt.s32.f32 %v207
        %v209 = vld [vmem:[#allocation2] sm:$0xff]
        %v210 = vld [vmem:[#allocation2 + $0x8] sm:$0xff]
        %vm211 = vcmask 130048
        %v213 = vsel %vm211, %v208, 0
        %215 = vmatpush.msra.mxu0 0.0
        %216 = vmatpush.msra.mxu0 0.0
        %217 = vmatpush.msra.mxu0 0.0
        %218 = vmatpush.msra.mxu0 0.0
        %219 = vmatpush.msra.mxu0 0.0
        %220 = vmatpush.msra.mxu0 0.0
        %221 = vmatpush.msra.mxu0 0.0
        %222 = vmatpush.msra.mxu0 0.0
        %223 = vmatpush.msra.mxu0 0.0
        %224 = vmatpush.msra.mxu0 0.0
        %225 = vmatpush.msra.mxu0 0.0
        %226 = vmatpush.msra.mxu0 0.0
        %227 = vmatpush.msra.mxu0 0.0
        %228 = vmatpush.msra.mxu0 0.0
        %229 = vmatpush.msra.mxu0 %v210
        %230 = vmatpush.msra.mxu0 %v209
        %231 = vmatmul.f32.gmra.mxu0 %v213
        %v232 = vpop.f32.mrf.mxu0
        %v233 = vadd.f32 0.0, %v232
        %234 = vdwg.mxu0
        %v235 = vld [vmem:[%s199] sm:$0xff]
        %v236 = vadd.f32 %v235, %v233
        %237 = vst [vmem:[%s191] sm:$0xff] %v236
        %s238 = sand.u32 %s99, 1
        %s239 = scalar_lea.sflag [#allocation4], %s238
        %s240 = sand.u32 %s99, 1
        %s241 = smul.addr %s240, 8
        %s242 = scalar_lea.vmem [#allocation5], %s241
        // Predicated region
        $region37: #{tpu_custom_call.1} parent=31 // pred_check
          %p243 = pneg %p109
        $region38: #{tpu_custom_call.1} parent=31 // pred_check_branch
          %245 = sbr.rel (%p243) target = $region40
        $region39: #{tpu_custom_call.1} parent=31 // pred_region
          %247 = vsyncadd %s239, 0
          %s248 = smul.addr %s18, 8
          %s249 = scalar_lea.hbm %s3, %s248
          %s251 = sshll.u32 %s242, 4
          %s252 = int_to_ptr.vmem [resolvable:$true] %s251
          %s253 = sshll.u32 %s249, 4
          %s254 = int_to_ptr.hbm [resolvable:$true] %s253
          %256 = dma.vmem_to_hbm [thread:$0]  %s252, 128, %s254, %s239
        $region40: #{tpu_custom_call.1} parent=31 // pred_fallthru
          _
      $region32: #{tpu_custom_call.1} parent=5 // pred_fallthru
        _
      %p257 = scmp.le.s32.totalorder 2, %s13
      // Predicated region
      $region41: #{tpu_custom_call.1} parent=5 // pred_check
        %p258 = pneg %p257
      $region42: #{tpu_custom_call.1} parent=5 // pred_check_branch
        %260 = sbr.rel (%p258) target = $region44
      $region43: #{tpu_custom_call.1} parent=5 // pred_region
        %s261 = ssub.s32 %s13, 2
        // Predicated region
        $region45: #{tpu_custom_call.1} parent=43 // pred_check
          %p262 = pneg %p115
        $region46: #{tpu_custom_call.1} parent=43 // pred_check_branch
          %264 = sbr.rel (%p262) target = $region48
        $region47: #{tpu_custom_call.1} parent=43 // pred_region
          %s265 = sand.u32 %s100, 1
          %s266 = scalar_lea.sflag [#allocation4], %s265
          %s267 = sand.u32 %s100, 1
          %s268 = smul.addr %s267, 8
          %s269 = scalar_lea.vmem [#allocation5], %s268
          %271 = dma.done %s266, 128
        $region48: #{tpu_custom_call.1} parent=43 // pred_fallthru
          _
      $region44: #{tpu_custom_call.1} parent=5 // pred_fallthru
        _
    $region6: #{tpu_custom_call.1} parent=1 // loop_footer
      %s17 = sadd.s32 1, %s13
    $region7: #{tpu_custom_call.1} parent=1 // loop_footer_branch
      %12 = sbr.rel target = $region3
    $region8: #{tpu_custom_call.1} parent=1 // loop_exit
      _
    %272 = vsyncpa [#allocation3], 1
    %s273 = scalar_lea.sflag [#allocation3], 1
    %274 = vsyncpa %s273, 1
    %275 = vsyncpa [#allocation4], 1
    %s276 = scalar_lea.sflag [#allocation4], 1
    %277 = vsyncpa %s276, 1

</llo_original>
